<compile_context>
chip_gen: v5e
topology: v5e:2x2
jax: 0.10.0
libtpu: 0.0.40
codegen_flags: <defaults>
</compile_context>

<pallas_src>
import numpy as np
import jax
import jax.numpy as jnp
from jax import lax
from jax.experimental import pallas as pl
from jax.experimental.pallas import tpu as pltpu


_MAX_BLOCK_BYTES = 2 * 1024 * 1024          # ~2 MiB per input block
_VMEM_LIMIT_BYTES = 32 * 1024 * 1024        # safe on v5e/v6e/v7x


def _is_pow2(n):
    return n > 0 and (n & (n - 1)) == 0


# ----------------------------------------------------------------------------
# Pallas kernel: separable shifted weighted sum on a flattened (rows, F) block
# ----------------------------------------------------------------------------
def _make_blur_kernel(passes, compute_dtype):
    """passes: tuple of (weights, step, extent), applied in order along the
    last (flattened) block axis.  Each pass computes
        out[p] = sum_a w[a] * in[p + (a - pad) * step]
    with zero boundary handling wherever the shifted position leaves its
    length-`extent` group along that step direction."""

    def kernel(x_ref, o_ref):
        ndim = len(x_ref.shape)
        F = x_ref.shape[-1]
        pos = lax.broadcasted_iota(jnp.int32, x_ref.shape, ndim - 1)
        cur = x_ref[...].astype(compute_dtype)

        for weights, step, extent in passes:
            klen = len(weights)
            pad = (klen - 1) // 2

            # Coordinate of p along this pass's logical axis (avoid div/mod
            # where possible: thresholds on pos, or bit-ops for pow-2 extents).
            if extent * step == F:
                coord = None
            elif step == 1 and _is_pow2(extent):
                coord = pos & (extent - 1)
            else:
                coord = (pos // step) % extent  # rare (non-pow-2) shapes

            acc = None
            for a in range(klen):
                off = a - pad
                w = float(weights[a])
                if w == 0.0:
                    continue
                if off == 0:
                    term = cur
                else:
                    # shifted[p] = cur[p + off*step] (circular); mask the wrap.
                    shifted = pltpu.roll(cur, (-off * step) % F, axis=ndim - 1)
                    if coord is None:
                        lo = max(0, -off) * step
                        hi = min(extent, extent - off) * step
                        valid = (pos >= lo) & (pos < hi)
                    else:
                        c = coord + off
                        valid = (c >= 0) & (c < extent)
                    term = jnp.where(valid, shifted, jnp.zeros_like(shifted))
                term = w * term
                acc = term if acc is None else acc + term
            cur = acc

        o_ref[...] = cur.astype(o_ref.dtype)

    return kernel


# ----------------------------------------------------------------------------
# Tiling / pallas_call wrapper
# ----------------------------------------------------------------------------
def _pick_row_tile(R, F, itemsize):
    """Row tile: full R if it fits the block budget, else the largest
    multiple-of-8 divisor of R (TPU sublane rule for partial blocks)."""
    row_bytes = F * itemsize
    if R * row_bytes <= _MAX_BLOCK_BYTES:
        return R
    best = None
    for d in range(8, R, 8):
        if R % d == 0 and d * row_bytes <= _MAX_BLOCK_BYTES:
            best = d
    if best is None:
        # TODO(synk): rows cannot be tiled (tiny R, huge F); fall back to
        # whole-R blocks and rely on the raised VMEM limit.
        return R
    return best


def _blur_flat(xf, passes):
    R, F = xf.shape
    rt = _pick_row_tile(R, F, xf.dtype.itemsize)
    grid = (R // rt,)
    compute_dtype = xf.dtype if jnp.issubdtype(xf.dtype, jnp.floating) else jnp.float32
    kern = _make_blur_kernel(passes, compute_dtype)
    return pl.pallas_call(
        kern,
        out_shape=jax.ShapeDtypeStruct((R, F), xf.dtype),
        grid_spec=pltpu.PrefetchScalarGridSpec(
            num_scalar_prefetch=0,
            grid=grid,
            in_specs=[pl.BlockSpec((rt, F), lambda i: (i, 0))],
            out_specs=pl.BlockSpec((rt, F), lambda i: (i, 0)),
        ),
        compiler_params=pltpu.CompilerParams(
            dimension_semantics=("parallel",),
            vmem_limit_bytes=_VMEM_LIMIT_BYTES,
        ),
    )(xf)


# ----------------------------------------------------------------------------
# Module wrapper (mirrors BlurLayer semantics)
# ----------------------------------------------------------------------------
class BlurLayerPallas:
    def __init__(self, dimension, kernel=(1, 2, 1), normalize=True, stride=1):
        self.dimension = dimension
        self.normalize = normalize
        self.stride = stride
        k = np.asarray(kernel, dtype=np.float32)
        if k.ndim != 1 or len(k) % 2 != 1:
            raise NotImplementedError("only odd 1-D blur kernels supported")
        if dimension == 2:
            k2 = k[:, None] * k[None, :]
            self.kvals = k2 / k2.sum() if normalize else k2
            # separable factor: kvals == outer(factor, factor)
            self.factor = (k / k.sum()) if normalize else k
        elif dimension == 1:
            k1 = k * k
            self.kvals = k1 / k1.sum() if normalize else k1
        else:
            raise ValueError(f"dimension {dimension} not supported")

    def __call__(self, x):
        if x.ndim == 4:
            if self.dimension != 2:
                raise ValueError("4-D input requires dimension=2")
            return self._forward2d(x)
        elif x.ndim == 3:
            if self.dimension != 1:
                raise ValueError("3-D input requires dimension=1")
            return self._forward1d(x)
        raise Exception(f"Input dimensions {x.shape} not supported")

    def _forward2d(self, x):
        N, C, H, W = x.shape
        f = tuple(float(v) for v in self.factor)
        passes = (
            (f, W, H),   # vertical pass: rolls by +-k*W, masked on rows
            (f, 1, W),   # horizontal pass: rolls by +-k, masked on columns
        )
        xf = x.reshape(N * C, H * W)          # free: merges contiguous dims
        y = _blur_flat(xf, passes).reshape(N, C, H, W)
        if self.stride != 1:
            # TODO(synk): compute only the strided outputs in-kernel (saves
            # ~stride^2 output HBM traffic); post-slice keeps exact conv
            # semantics for symmetric padding.
            y = y[:, :, ::self.stride, ::self.stride]
        return y

    def _forward1d(self, x):
        N, C, L = x.shape
        w = tuple(float(v) for v in self.kvals)
        passes = ((w, 1, L),)                 # single pass, masked on position % L
        xf = x.reshape(N, C * L)              # free: merges contiguous dims
        y = _blur_flat(xf, passes).reshape(N, C, L)
        if self.stride != 1:
            y = y[:, :, ::self.stride]
        return y


# ----------------------------------------------------------------------------
# Pure-JAX reference (depthwise conv, correctness check only)
# ----------------------------------------------------------------------------
def _ref_blur2d(x, kvals, stride):
    C = x.shape[1]
    w = jnp.broadcast_to(jnp.asarray(kvals)[None, None], (C, 1, *kvals.shape))
    pad = (kvals.shape[0] - 1) // 2
    return lax.conv_general_dilated(
        x, w, window_strides=(stride, stride),
        padding=((pad, pad), (pad, pad)),
        dimension_numbers=("NCHW", "OIHW", "NCHW"),
        feature_group_count=C)


def _ref_blur1d(x, kvals, stride):
    C = x.shape[1]
    w = jnp.broadcast_to(jnp.asarray(kvals)[None, None], (C, 1, kvals.shape[0]))
    pad = (kvals.shape[0] - 1) // 2
    return lax.conv_general_dilated(
        x, w, window_strides=(stride,),
        padding=((pad, pad),),
        dimension_numbers=("NCH", "OIH", "NCH"),
        feature_group_count=C)


if __name__ == "__main__":
    key = jax.random.PRNGKey(0)
    k1, k2 = jax.random.split(key)

    # 2-D (NCHW) case, dimension=2, stride=1
    x4 = jax.random.normal(k1, (2, 4, 16, 16), dtype=jnp.float32)
    blur2d = BlurLayerPallas(dimension=2, kernel=(1, 2, 1), normalize=True, stride=1)
    y4 = jax.block_until_ready(blur2d(x4))
    ref4 = _ref_blur2d(x4, blur2d.kvals, stride=1)
    assert y4.shape == (2, 4, 16, 16)
    assert jnp.allclose(y4, ref4, atol=1e-5), "2D blur mismatch"

    # 2-D case with stride=2 (post-slice path)
    blur2d_s2 = BlurLayerPallas(dimension=2, kernel=(1, 2, 1), normalize=True, stride=2)
    y4s = jax.block_until_ready(blur2d_s2(x4))
    ref4s = _ref_blur2d(x4, blur2d_s2.kvals, stride=2)
    assert y4s.shape == ref4s.shape
    assert jnp.allclose(y4s, ref4s, atol=1e-5), "2D strided blur mismatch"

    # 1-D (NCL) case, dimension=1
    x3 = jax.random.normal(k2, (2, 4, 32), dtype=jnp.float32)
    blur1d = BlurLayerPallas(dimension=1, kernel=(1, 2, 1), normalize=True, stride=1)
    y3 = jax.block_until_ready(blur1d(x3))
    ref3 = _ref_blur1d(x3, blur1d.kvals, stride=1)
    assert y3.shape == (2, 4, 32)
    assert jnp.allclose(y3, ref3, atol=1e-5), "1D blur mismatch"

    print("KERNEL_OK")
</pallas_src>

<mosaic_0001>
module attributes {stable_mosaic.version = 11 : i64} {
  func.func @kernel(%arg0: i32, %arg1: memref<8x256xf32, #tpu.memory_space<vmem>>, %arg2: memref<8x256xf32, #tpu.memory_space<vmem>>) attributes {dimension_semantics = [#tpu.dimension_semantics<parallel>], iteration_bounds = array<i64: 1>, scalar_prefetch = 0 : i64, scratch_operands = 0 : i64, tpu.core_type = #tpu.core_type<tc>, window_params = [{transform_indices = @transform_0, window_bounds = array<i64: 8, 256>}, {transform_indices = @transform_1, window_bounds = array<i64: 8, 256>}]} {
    %0 = tpu.iota {dimensions = array<i32: 1>} : vector<8x256xi32>
    %c0 = arith.constant 0 : index
    %c0_0 = arith.constant 0 : index
    %1 = vector.load %arg1[%c0, %c0_0] : memref<8x256xf32, #tpu.memory_space<vmem>>, vector<8x256xf32>
    %c16_i32 = arith.constant 16 : i32
    %2 = tpu.dynamic_rotate %1 by %c16_i32 dim 1 : vector<8x256xf32>, i32 -> vector<8x256xf32>
    %c16_i32_1 = arith.constant 16 : i32
    %3 = vector.broadcast %c16_i32_1 : i32 to vector<8x256xi32>
    %4 = arith.cmpi sge, %0, %3 : vector<8x256xi32>
    %c256_i32 = arith.constant 256 : i32
    %5 = vector.broadcast %c256_i32 : i32 to vector<8x256xi32>
    %6 = arith.cmpi slt, %0, %5 : vector<8x256xi32>
    %7 = arith.andi %4, %6 : vector<8x256xi1>
    %cst = arith.constant 0.000000e+00 : f32
    %8 = vector.broadcast %cst : f32 to vector<8x256xf32>
    %9 = arith.select %7, %2, %8 : vector<8x256xi1>, vector<8x256xf32>
    %cst_2 = arith.constant 2.500000e-01 : f32
    %10 = vector.broadcast %cst_2 : f32 to vector<8x256xf32>
    %11 = arith.mulf %10, %9 : vector<8x256xf32>
    %cst_3 = arith.constant 5.000000e-01 : f32
    %12 = vector.broadcast %cst_3 : f32 to vector<8x256xf32>
    %13 = arith.mulf %12, %1 : vector<8x256xf32>
    %14 = arith.addf %11, %13 : vector<8x256xf32>
    %c240_i32 = arith.constant 240 : i32
    %15 = tpu.dynamic_rotate %1 by %c240_i32 dim 1 : vector<8x256xf32>, i32 -> vector<8x256xf32>
    %c0_i32 = arith.constant 0 : i32
    %16 = vector.broadcast %c0_i32 : i32 to vector<8x256xi32>
    %17 = arith.cmpi sge, %0, %16 : vector<8x256xi32>
    %c240_i32_4 = arith.constant 240 : i32
    %18 = vector.broadcast %c240_i32_4 : i32 to vector<8x256xi32>
    %19 = arith.cmpi slt, %0, %18 : vector<8x256xi32>
    %20 = arith.andi %17, %19 : vector<8x256xi1>
    %cst_5 = arith.constant 0.000000e+00 : f32
    %21 = vector.broadcast %cst_5 : f32 to vector<8x256xf32>
    %22 = arith.select %20, %15, %21 : vector<8x256xi1>, vector<8x256xf32>
    %cst_6 = arith.constant 2.500000e-01 : f32
    %23 = vector.broadcast %cst_6 : f32 to vector<8x256xf32>
    %24 = arith.mulf %23, %22 : vector<8x256xf32>
    %25 = arith.addf %14, %24 : vector<8x256xf32>
    %c15_i32 = arith.constant 15 : i32
    %26 = vector.broadcast %c15_i32 : i32 to vector<8x256xi32>
    %27 = arith.andi %0, %26 : vector<8x256xi32>
    %c1_i32 = arith.constant 1 : i32
    %28 = tpu.dynamic_rotate %25 by %c1_i32 dim 1 : vector<8x256xf32>, i32 -> vector<8x256xf32>
    %c-1_i32 = arith.constant -1 : i32
    %29 = vector.broadcast %c-1_i32 : i32 to vector<8x256xi32>
    %30 = arith.addi %27, %29 : vector<8x256xi32>
    %c0_i32_7 = arith.constant 0 : i32
    %31 = vector.broadcast %c0_i32_7 : i32 to vector<8x256xi32>
    %32 = arith.cmpi sge, %30, %31 : vector<8x256xi32>
    %c16_i32_8 = arith.constant 16 : i32
    %33 = vector.broadcast %c16_i32_8 : i32 to vector<8x256xi32>
    %34 = arith.cmpi slt, %30, %33 : vector<8x256xi32>
    %35 = arith.andi %32, %34 : vector<8x256xi1>
    %cst_9 = arith.constant 0.000000e+00 : f32
    %36 = vector.broadcast %cst_9 : f32 to vector<8x256xf32>
    %37 = arith.select %35, %28, %36 : vector<8x256xi1>, vector<8x256xf32>
    %cst_10 = arith.constant 2.500000e-01 : f32
    %38 = vector.broadcast %cst_10 : f32 to vector<8x256xf32>
    %39 = arith.mulf %38, %37 : vector<8x256xf32>
    %cst_11 = arith.constant 5.000000e-01 : f32
    %40 = vector.broadcast %cst_11 : f32 to vector<8x256xf32>
    %41 = arith.mulf %40, %25 : vector<8x256xf32>
    %42 = arith.addf %39, %41 : vector<8x256xf32>
    %c255_i32 = arith.constant 255 : i32
    %43 = tpu.dynamic_rotate %25 by %c255_i32 dim 1 : vector<8x256xf32>, i32 -> vector<8x256xf32>
    %c1_i32_12 = arith.constant 1 : i32
    %44 = vector.broadcast %c1_i32_12 : i32 to vector<8x256xi32>
    %45 = arith.addi %27, %44 : vector<8x256xi32>
    %c0_i32_13 = arith.constant 0 : i32
    %46 = vector.broadcast %c0_i32_13 : i32 to vector<8x256xi32>
    %47 = arith.cmpi sge, %45, %46 : vector<8x256xi32>
    %c16_i32_14 = arith.constant 16 : i32
    %48 = vector.broadcast %c16_i32_14 : i32 to vector<8x256xi32>
    %49 = arith.cmpi slt, %45, %48 : vector<8x256xi32>
    %50 = arith.andi %47, %49 : vector<8x256xi1>
    %cst_15 = arith.constant 0.000000e+00 : f32
    %51 = vector.broadcast %cst_15 : f32 to vector<8x256xf32>
    %52 = arith.select %50, %43, %51 : vector<8x256xi1>, vector<8x256xf32>
    %cst_16 = arith.constant 2.500000e-01 : f32
    %53 = vector.broadcast %cst_16 : f32 to vector<8x256xf32>
    %54 = arith.mulf %53, %52 : vector<8x256xf32>
    %55 = arith.addf %42, %54 : vector<8x256xf32>
    %c0_17 = arith.constant 0 : index
    %c0_18 = arith.constant 0 : index
    %56 = vector.load %arg2[%c0_17, %c0_18] : memref<8x256xf32, #tpu.memory_space<vmem>>, vector<8x256xf32>
    tpu.vector_store %arg2[%c0_17, %c0_18], %55 {strides = array<i32>} : memref<8x256xf32, #tpu.memory_space<vmem>>, vector<8x256xf32>,
    return
  }
  func.func @transform_0(%arg0: i32) -> (i32, i32) {
    %c0_i32 = arith.constant 0 : i32
    %c0_i32_0 = arith.constant 0 : i32
    return %arg0, %c0_i32 : i32, i32
  }
  func.func @transform_1(%arg0: i32) -> (i32, i32) {
    %c0_i32 = arith.constant 0 : i32
    %c0_i32_0 = arith.constant 0 : i32
    return %arg0, %c0_i32 : i32, i32
  }
}

</mosaic_0001>

<llo_original>
// kernel: tpu_custom_call.1
$region0: #{tpu_custom_call.1}
  #allocation0 [shape = 'u32[]', space=smem, size = 0x4, offset = 0x4, fixed_abs, tag = 'smem constant byte address 0x4 - core index']
  #allocation1 [shape = 'u32[72,128]{1,0:T(1,128)}', space=vmem, size = 0x9000, scoped, tag = 'internal scratch']
  %s0 = inlined_call_operand.hbm [shape: f32[8,256], index: 0, kind: input, shape index: {}]
  %s1 = inlined_call_operand.hbm [shape: f32[8,256], index: 1, kind: output, shape index: {}]
  %s2 = sld [smem:[#allocation0]]
  $region18: #{tpu_custom_call.1} parent=0
    _
  %s4 = ssub.s32 1, %s2
  %s5 = scalar_select 0, %s4, %s2
  $region1: #{tpu_custom_call.1} parent=0
    #allocation2 [shape = 'u8[8192]{0}', space=vmem, size = 0x2000, scoped, tag = 'input window, operand 0, single buffered']
    #allocation3 [shape = 's32[1]{0}', space=sflag, size = 0x4, scoped, tag = 'scoped memory for tpu_custom_call.1']
    #allocation4 [shape = 's32[1]{0}', space=sflag, size = 0x4, scoped, tag = 'scoped memory for tpu_custom_call.1']
    #allocation5 [shape = 'u8[8192]{0}', space=vmem, size = 0x2000, scoped, tag = 'output window, operand 0, single buffered']
    %6 = vsyncpa [#allocation3], 0
    %7 = vsyncpa [#allocation4], 0
    // Predicated region
    $region2: #{tpu_custom_call.1} parent=1 // pred_check
      _
    $region3: #{tpu_custom_call.1} parent=1 // pred_check_branch
      %9 = sbr.rel (0) target = $region5
    $region4: #{tpu_custom_call.1} parent=1 // pred_region
      %11 = vsyncadd [#allocation3], 0
      %s13 = sshll.u32 %s0, 4
      %s14 = int_to_ptr.hbm [resolvable:$true] %s13
      %s15 = sshll.u32 [#allocation2], 4
      %s16 = int_to_ptr.vmem [resolvable:$true] %s15
      %18 = dma.hbm_to_vmem [thread:$0]  %s14, 256, %s16, [#allocation3]
    $region5: #{tpu_custom_call.1} parent=1 // pred_fallthru
      _
    // Predicated region
    $region6: #{tpu_custom_call.1} parent=1 // pred_check
      _
    $region7: #{tpu_custom_call.1} parent=1 // pred_check_branch
      %20 = sbr.rel (0) target = $region9
    $region8: #{tpu_custom_call.1} parent=1 // pred_region
      %22 = dma.done [#allocation3], 256
    $region9: #{tpu_custom_call.1} parent=1 // pred_fallthru
      _
    %v23 = vlaneseq
    %v24 = vand.u32 %v23, 127
    %v25 = vadd.s32 %v24, 128
    %v26 = vld [vmem:[#allocation2] sm:$0xff]
    %v27 = vld [vmem:[#allocation2 + $0x8] sm:$0xff]
    %28 = vrot.lane.b32.xlu0 %v26, 16
    %v29 = vpop.permute.xlu0 %28
    %30 = vrot.lane.b32.xlu0 %v27, 16
    %v31 = vpop.permute.xlu0 %30
    %vm32 = vcmp.lt.s32.totalorder %v24, 16
    %v33 = vsel %vm32, %v29, %v31
    %v34 = vsel %vm32, %v31, %v29
    %vm35 = vcmp.ge.s32.totalorder %v24, 16
    %vm36 = vcmp.ge.s32.totalorder %v25, 16
    %vm37 = vcmp.lt.s32.totalorder %v24, 256
    %vm38 = vcmp.lt.s32.totalorder %v25, 256
    %vm39 = vmand %vm35, %vm37
    %vm40 = vmand %vm36, %vm38
    %v41 = vsel %vm39, %v34, 0.0
    %v42 = vsel %vm40, %v33, 0.0
    %v43 = vmul.f32 %v41, 0.25
    %v44 = vmul.f32 %v42, 0.25
    %v45 = vmul.f32 %v26, 0.5
    %v46 = vmul.f32 %v27, 0.5
    %v47 = vadd.f32 %v43, %v45
    %v48 = vadd.f32 %v44, %v46
    %49 = vrot.lane.b32.xlu0 %v26, 112
    %v50 = vpop.permute.xlu0 %49
    %51 = vrot.lane.b32.xlu0 %v27, 112
    %v52 = vpop.permute.xlu0 %51
    %vm53 = vcmp.lt.s32.totalorder %v24, 112
    %v54 = vsel %vm53, %v50, %v52
    %v55 = vsel %vm53, %v52, %v50
    %vm56 = vcmp.ge.s32.totalorder %v24, 0
    %vm57 = vcmp.ge.s32.totalorder %v25, 0
    %vm58 = vcmp.lt.s32.totalorder %v24, 240
    %vm59 = vcmp.lt.s32.totalorder %v25, 240
    %vm60 = vmand %vm56, %vm58
    %vm61 = vmand %vm57, %vm59
    %v62 = vsel %vm60, %v54, 0.0
    %v63 = vsel %vm61, %v55, 0.0
    %v64 = vmul.f32 %v62, 0.25
    %v65 = vmul.f32 %v63, 0.25
    %v66 = vadd.f32 %v47, %v64
    %v67 = vadd.f32 %v48, %v65
    %v68 = vand.u32 %v24, 15
    %v69 = vand.u32 %v25, 15
    %70 = vrot.lane.b32.xlu0 %v66, 1
    %v71 = vpop.permute.xlu0 %70
    %72 = vrot.lane.b32.xlu0 %v67, 1
    %v73 = vpop.permute.xlu0 %72
    %vm74 = vcmp.lt.s32.totalorder %v24, 1
    %v75 = vsel %vm74, %v71, %v73
    %v76 = vsel %vm74, %v73, %v71
    %v77 = vadd.s32 %v68, 4294967295
    %v78 = vadd.s32 %v69, 4294967295
    %vm79 = vcmp.ge.s32.totalorder %v77, 0
    %vm80 = vcmp.ge.s32.totalorder %v78, 0
    %vm81 = vcmp.lt.s32.totalorder %v77, 16
    %vm82 = vcmp.lt.s32.totalorder %v78, 16
    %vm83 = vmand %vm79, %vm81
    %vm84 = vmand %vm80, %vm82
    %v85 = vsel %vm83, %v76, 0.0
    %v86 = vsel %vm84, %v75, 0.0
    %v87 = vmul.f32 %v85, 0.25
    %v88 = vmul.f32 %v86, 0.25
    %v89 = vmul.f32 %v66, 0.5
    %v90 = vmul.f32 %v67, 0.5
    %v91 = vadd.f32 %v87, %v89
    %v92 = vadd.f32 %v88, %v90
    %93 = vrot.lane.b32.xlu0 %v66, 127
    %v94 = vpop.permute.xlu0 %93
    %95 = vrot.lane.b32.xlu0 %v67, 127
    %v96 = vpop.permute.xlu0 %95
    %vm97 = vcmp.lt.s32.totalorder %v24, 127
    %v98 = vsel %vm97, %v94, %v96
    %v99 = vsel %vm97, %v96, %v94
    %v100 = vadd.s32 %v68, 1
    %v101 = vadd.s32 %v69, 1
    %vm102 = vcmp.ge.s32.totalorder %v100, 0
    %vm103 = vcmp.ge.s32.totalorder %v101, 0
    %vm104 = vcmp.lt.s32.totalorder %v100, 16
    %vm105 = vcmp.lt.s32.totalorder %v101, 16
    %vm106 = vmand %vm102, %vm104
    %vm107 = vmand %vm103, %vm105
    %v108 = vsel %vm106, %v98, 0.0
    %v109 = vsel %vm107, %v99, 0.0
    %v110 = vmul.f32 %v108, 0.25
    %v111 = vmul.f32 %v109, 0.25
    %v112 = vadd.f32 %v91, %v110
    %v113 = vadd.f32 %v92, %v111
    %114 = vst [vmem:[#allocation5] sm:$0xff] %v112
    %115 = vst [vmem:[#allocation5 + $0x8] sm:$0xff] %v113
    // Predicated region
    $region10: #{tpu_custom_call.1} parent=1 // pred_check
      _
    $region11: #{tpu_custom_call.1} parent=1 // pred_check_branch
      %117 = sbr.rel (0) target = $region13
    $region12: #{tpu_custom_call.1} parent=1 // pred_region
      %119 = vsyncadd [#allocation4], 0
      %s121 = sshll.u32 [#allocation5], 4
      %s122 = int_to_ptr.vmem [resolvable:$true] %s121
      %s123 = sshll.u32 %s1, 4
      %s124 = int_to_ptr.hbm [resolvable:$true] %s123
      %126 = dma.vmem_to_hbm [thread:$0]  %s122, 256, %s124, [#allocation4]
    $region13: #{tpu_custom_call.1} parent=1 // pred_fallthru
      _
    // Predicated region
    $region14: #{tpu_custom_call.1} parent=1 // pred_check
      _
    $region15: #{tpu_custom_call.1} parent=1 // pred_check_branch
      %128 = sbr.rel (0) target = $region17
    $region16: #{tpu_custom_call.1} parent=1 // pred_region
      %130 = dma.done [#allocation4], 256
    $region17: #{tpu_custom_call.1} parent=1 // pred_fallthru
      _
    %131 = vsyncpa [#allocation3], 1
    %132 = vsyncpa [#allocation4], 1

</llo_original>
